<compile_context>
chip_gen: v6e
topology: v6e:2x2x1
jax: 0.10.0
libtpu: 0.0.40
codegen_flags: <defaults>
</compile_context>

<pallas_src>
import jax
import jax.numpy as jnp
from jax.experimental import pallas as pl
from jax.experimental.pallas import tpu as pltpu


def _l1ra_kernel(x_ref, w_ref, bias_ref, h_ref, b_ref, o_ref, acc_ref):
    # x_ref:    (tm, tk)  input tile (compute dtype)
    # w_ref:    (tk, tn)  base weight tile, (in, out) layout -> plain matmul
    # bias_ref: (1, tn)   base bias tile (f32)
    # h_ref:    (tm, r)   precomputed (x @ lora_A) * clamp(c,0,1) * scaling
    # b_ref:    (r, tn)   lora_B tile (compute dtype)
    # o_ref:    (tm, tn)  output tile (original x dtype)
    # acc_ref:  (tm, tn)  f32 accumulator, resident across the K grid axis
    k = pl.program_id(2)

    @pl.when(k == 0)
    def _():
        # Fold the bias add into the accumulator init (saves one VPU add in
        # the last-k epilogue).
        acc_ref[...] = jnp.broadcast_to(bias_ref[...], acc_ref.shape)

    # Plain [tm, tk] x [tk, tn] MXU matmul with f32 accumulation.
    acc_ref[...] += jnp.dot(x_ref[...], w_ref[...],
                            preferred_element_type=jnp.float32)

    @pl.when(k == pl.num_programs(2) - 1)
    def _():
        # Adapter up-projection: one small (tm, r) x (r, tn) MXU pass per tile.
        delta = jnp.dot(h_ref[...], b_ref[...],
                        preferred_element_type=jnp.float32)
        o_ref[...] = (acc_ref[...] + delta).astype(o_ref.dtype)


def _round_up(x, m):
    return ((x + m - 1) // m) * m


def _pick_tile(dim, preferred, align):
    """Tile <= preferred (which is align-multiple); wrapper pads dim to tile."""
    if dim >= preferred:
        return preferred
    return _round_up(dim, align)


def _pad2d(a, rows, cols):
    pr, pc = rows - a.shape[0], cols - a.shape[1]
    if pr or pc:
        a = jnp.pad(a, ((0, pr), (0, pc)))
    return a


def l1ra_linear(x, weight, bias, lora_A, lora_B, lora_c, scaling,
                *, tm=512, tn=512, tk=512, compute_dtype=None):
    """Fused base-linear + L1RA adapter forward.

    x:       (batch, seq, in_features)
    weight:  (out_features, in_features)   -- torch nn.Linear layout
    bias:    (out_features,)
    lora_A:  (in_features, r)
    lora_B:  (r, out_features)
    lora_c:  (r,)
    compute_dtype: dtype fed to the MXU (f32 accumulation either way).
        None -> use x.dtype. Pass jnp.bfloat16 for native MXU rate.
    """
    batch, seq, in_features = x.shape
    out_features, wk = weight.shape
    assert wk == in_features
    r = lora_A.shape[1]

    M, K, N = batch * seq, in_features, out_features
    out_dtype = x.dtype
    if compute_dtype is None:
        compute_dtype = x.dtype

    x2d = x.reshape(M, K).astype(compute_dtype)
    wT = weight.T.astype(compute_dtype)          # one-time (K, N) transpose
    Bc = lora_B.astype(compute_dtype)
    bias2d = bias.astype(jnp.float32).reshape(1, N)

    # Hoisted adapter down-projection: native-dtype GEMM, f32 accumulate,
    # clamp + scaling folded into the O(r) factor, then cast to compute dtype.
    c = jnp.clip(lora_c.astype(jnp.float32), 0.0, 1.0) * jnp.float32(scaling)
    h = (jnp.dot(x2d, lora_A.astype(compute_dtype),
                 preferred_element_type=jnp.float32) * c[None, :]
         ).astype(compute_dtype)
    # TODO(synk): optionally fuse the h-GEMM into the kernel (accumulate
    # x_tile @ lora_A over k at j==0) if the extra HBM read of x shows up.

    # --- tile selection (preferred tiles are 256-aligned for v6e/v7x MXU) ---
    tm = _pick_tile(M, tm, 8)
    tn = _pick_tile(N, tn, 128)
    tk = _pick_tile(K, tk, 128)
    Mp, Np, Kp = _round_up(M, tm), _round_up(N, tn), _round_up(K, tk)

    # Keep >= 2 programs across the parallel axes so both v7x TensorCores work.
    while (Mp // tm) * (Np // tn) < 2:
        if tn > 128:
            tn = max(128, (tn // 2 // 128) * 128)
            Np = _round_up(N, tn)
        elif tm > 8:
            tm = max(8, _round_up(tm // 2, 8))
            Mp = _round_up(M, tm)
        else:
            break

    # --- pad operands to tile multiples (zero padding is exact for matmul) ---
    x_p = _pad2d(x2d, Mp, Kp)
    w_p = _pad2d(wT, Kp, Np)
    bias_p = _pad2d(bias2d, 1, Np)
    h_p = _pad2d(h, Mp, r)
    B_p = _pad2d(Bc, r, Np)

    grid = (Mp // tm, Np // tn, Kp // tk)

    # VMEM budget: double-buffered inputs/output + f32 accumulator.
    csz = jnp.dtype(compute_dtype).itemsize
    osz = jnp.dtype(out_dtype).itemsize
    footprint = (2 * (tm * tk * csz + tk * tn * csz + tn * 4
                      + tm * r * csz + r * tn * csz + tm * tn * osz)
                 + tm * tn * 4)
    vmem_limit = int(min(48 << 20, max(32 << 20, 2 * footprint)))

    out2d = pl.pallas_call(
        _l1ra_kernel,
        out_shape=jax.ShapeDtypeStruct((Mp, Np), out_dtype),
        grid_spec=pltpu.PrefetchScalarGridSpec(
            num_scalar_prefetch=0,
            grid=grid,
            in_specs=[
                pl.BlockSpec((tm, tk), lambda i, j, k: (i, k)),   # x tile
                pl.BlockSpec((tk, tn), lambda i, j, k: (k, j)),   # W^T tile
                pl.BlockSpec((1, tn), lambda i, j, k: (0, j)),    # bias tile
                pl.BlockSpec((tm, r), lambda i, j, k: (i, 0)),    # h tile
                pl.BlockSpec((r, tn), lambda i, j, k: (0, j)),    # lora_B tile
            ],
            out_specs=pl.BlockSpec((tm, tn), lambda i, j, k: (i, j)),
            scratch_shapes=[pltpu.VMEM((tm, tn), jnp.float32)],
        ),
        compiler_params=pltpu.CompilerParams(
            dimension_semantics=("parallel", "parallel", "arbitrary"),
            vmem_limit_bytes=vmem_limit,
        ),
    )(x_p, w_p, bias_p, h_p, B_p)

    return out2d[:M, :N].reshape(batch, seq, N)


def l1ra_linear_ref(x, weight, bias, lora_A, lora_B, lora_c, scaling):
    """Pure-JAX reference mirroring the PyTorch forward."""
    base = jnp.einsum("bsk,nk->bsn", x, weight) + bias
    c = jnp.clip(lora_c, 0.0, 1.0)
    delta = ((x @ lora_A) * c) @ lora_B * scaling
    return base + delta


if __name__ == "__main__":
    # Small shapes consistent with the module: an nn.Linear base layer with an
    # L1RA adapter of rank r.
    batch, seq = 2, 64
    in_features, out_features = 128, 256
    r = 8
    lora_alpha = 16
    scaling = lora_alpha / r  # as in update_layer

    key = jax.random.PRNGKey(0)
    kx, kw, kb, ka, kbb, kc = jax.random.split(key, 6)

    x = jax.random.normal(kx, (batch, seq, in_features), jnp.float32)
    weight = jax.random.normal(kw, (out_features, in_features), jnp.float32) * 0.05
    bias = jax.random.normal(kb, (out_features,), jnp.float32) * 0.1

    # Module init is A~N(0, 1/r), B=0, c=1; use nonzero B / varied c so the
    # adapter path is actually exercised (deterministic synthetic values).
    lora_A = jax.random.normal(ka, (in_features, r), jnp.float32) * (1.0 / r)
    lora_B = jax.random.normal(kbb, (r, out_features), jnp.float32) * 0.1
    lora_c = jax.random.uniform(kc, (r,), jnp.float32, -0.5, 1.5)  # clamp exercised

    # TODO(synk): dropout (p=0 -> identity) and merge/unmerge weight surgery are
    # parameter management on the host side, not part of the fused forward.

    ref = l1ra_linear_ref(x, weight, bias, lora_A, lora_B, lora_c, scaling)

    # 1) f32 path (exact vs. reference).
    out = l1ra_linear(x, weight, bias, lora_A, lora_B, lora_c, scaling)
    out = jax.block_until_ready(out)
    assert out.shape == (batch, seq, out_features)
    assert jnp.allclose(out, ref, atol=1e-4, rtol=1e-4), (
        float(jnp.max(jnp.abs(out - ref)))
    )

    # 2) bf16 operand path (f32 accumulation) -- expect bf16-level deviation.
    out_bf16 = l1ra_linear(x, weight, bias, lora_A, lora_B, lora_c, scaling,
                           compute_dtype=jnp.bfloat16)
    out_bf16 = jax.block_until_ready(out_bf16)
    assert jnp.allclose(out_bf16, ref, atol=5e-2, rtol=5e-2), (
        float(jnp.max(jnp.abs(out_bf16 - ref)))
    )

    # 3) awkward (non-divisible) shapes to exercise the padding path.
    b2, s2, k2, n2 = 2, 40, 96, 200
    x2 = jax.random.normal(kx, (b2, s2, k2), jnp.float32)
    w2 = jax.random.normal(kw, (n2, k2), jnp.float32) * 0.05
    b_2 = jax.random.normal(kb, (n2,), jnp.float32) * 0.1
    A2 = jax.random.normal(ka, (k2, r), jnp.float32) * (1.0 / r)
    B2 = jax.random.normal(kbb, (r, n2), jnp.float32) * 0.1
    out2 = l1ra_linear(x2, w2, b_2, A2, B2, lora_c, scaling)
    out2 = jax.block_until_ready(out2)
    ref2 = l1ra_linear_ref(x2, w2, b_2, A2, B2, lora_c, scaling)
    assert out2.shape == (b2, s2, n2)
    assert jnp.allclose(out2, ref2, atol=1e-4, rtol=1e-4), (
        float(jnp.max(jnp.abs(out2 - ref2)))
    )

    print("KERNEL_OK")
</pallas_src>

<mosaic_0001>
module attributes {stable_mosaic.version = 11 : i64} {
  func.func @_l1ra_kernel(%arg0: i32, %arg1: i32, %arg2: i32, %arg3: memref<128x128xf32, #tpu.memory_space<vmem>>, %arg4: memref<128x128xf32, #tpu.memory_space<vmem>>, %arg5: memref<1x128xf32, #tpu.memory_space<vmem>>, %arg6: memref<128x8xf32, #tpu.memory_space<vmem>>, %arg7: memref<8x128xf32, #tpu.memory_space<vmem>>, %arg8: memref<128x128xf32, #tpu.memory_space<vmem>>, %arg9: memref<128x128xf32, #tpu.memory_space<vmem>>) attributes {dimension_semantics = [#tpu.dimension_semantics<parallel>, #tpu.dimension_semantics<parallel>, #tpu.dimension_semantics<arbitrary>], iteration_bounds = array<i64: 1, 2, 1>, scalar_prefetch = 0 : i64, scratch_operands = 1 : i64, tpu.core_type = #tpu.core_type<tc>, window_params = [{transform_indices = @transform_0, window_bounds = array<i64: 128, 128>}, {transform_indices = @transform_1, window_bounds = array<i64: 128, 128>}, {transform_indices = @transform_2, window_bounds = array<i64: 1, 128>}, {transform_indices = @transform_3, window_bounds = array<i64: 128, 8>}, {transform_indices = @transform_4, window_bounds = array<i64: 8, 128>}, {transform_indices = @transform_5, window_bounds = array<i64: 128, 128>}]} {
    %c0_i32 = arith.constant 0 : i32
    %0 = arith.cmpi eq, %arg2, %c0_i32 : i32
    %1 = arith.extui %0 : i1 to i32
    %c0_i32_0 = arith.constant 0 : i32
    %2 = arith.cmpi ne, %1, %c0_i32_0 : i32
    scf.if %2 {
      %c0_10 = arith.constant 0 : index
      %c0_11 = arith.constant 0 : index
      %12 = vector.load %arg5[%c0_10, %c0_11] : memref<1x128xf32, #tpu.memory_space<vmem>>, vector<1x128xf32>
      %13 = vector.shape_cast %12 : vector<1x128xf32> to vector<1x128xf32>
      %14 = vector.broadcast %13 : vector<1x128xf32> to vector<128x128xf32>
      %c0_12 = arith.constant 0 : index
      %c0_13 = arith.constant 0 : index
      %15 = vector.load %arg9[%c0_12, %c0_13] : memref<128x128xf32, #tpu.memory_space<vmem>>, vector<128x128xf32>
      tpu.vector_store %arg9[%c0_12, %c0_13], %14 {strides = array<i32>} : memref<128x128xf32, #tpu.memory_space<vmem>>, vector<128x128xf32>,
    } else {
    }
    %c0 = arith.constant 0 : index
    %c0_1 = arith.constant 0 : index
    %3 = vector.load %arg9[%c0, %c0_1] : memref<128x128xf32, #tpu.memory_space<vmem>>, vector<128x128xf32>
    %c0_2 = arith.constant 0 : index
    %c0_3 = arith.constant 0 : index
    %4 = vector.load %arg3[%c0_2, %c0_3] : memref<128x128xf32, #tpu.memory_space<vmem>>, vector<128x128xf32>
    %c0_4 = arith.constant 0 : index
    %c0_5 = arith.constant 0 : index
    %5 = vector.load %arg4[%c0_4, %c0_5] : memref<128x128xf32, #tpu.memory_space<vmem>>, vector<128x128xf32>
    %cst = arith.constant dense<0.000000e+00> : vector<128x128xf32>
    %6 = tpu.matmul %4, %5, %cst {dimension_numbers = #tpu.dot_dimension_numbers<[1], [0], [0], [1], [0, 0, 1, 1], [], []>} : vector<128x128xf32>, vector<128x128xf32>, vector<128x128xf32> -> vector<128x128xf32>
    %7 = arith.addf %3, %6 : vector<128x128xf32>
    %c0_6 = arith.constant 0 : index
    %c0_7 = arith.constant 0 : index
    %8 = vector.load %arg9[%c0_6, %c0_7] : memref<128x128xf32, #tpu.memory_space<vmem>>, vector<128x128xf32>
    tpu.vector_store %arg9[%c0_6, %c0_7], %7 {strides = array<i32>} : memref<128x128xf32, #tpu.memory_space<vmem>>, vector<128x128xf32>,
    %c0_i32_8 = arith.constant 0 : i32
    %9 = arith.cmpi eq, %arg2, %c0_i32_8 : i32
    %10 = arith.extui %9 : i1 to i32
    %c0_i32_9 = arith.constant 0 : i32
    %11 = arith.cmpi ne, %10, %c0_i32_9 : i32
    scf.if %11 {
      %c0_10 = arith.constant 0 : index
      %c0_11 = arith.constant 0 : index
      %12 = vector.load %arg6[%c0_10, %c0_11] : memref<128x8xf32, #tpu.memory_space<vmem>>, vector<128x8xf32>
      %c0_12 = arith.constant 0 : index
      %c0_13 = arith.constant 0 : index
      %13 = vector.load %arg7[%c0_12, %c0_13] : memref<8x128xf32, #tpu.memory_space<vmem>>, vector<8x128xf32>
      %cst_14 = arith.constant dense<0.000000e+00> : vector<128x128xf32>
      %14 = tpu.matmul %12, %13, %cst_14 {dimension_numbers = #tpu.dot_dimension_numbers<[1], [0], [0], [1], [0, 0, 1, 1], [], []>} : vector<128x8xf32>, vector<8x128xf32>, vector<128x128xf32> -> vector<128x128xf32>
      %c0_15 = arith.constant 0 : index
      %c0_16 = arith.constant 0 : index
      %15 = vector.load %arg9[%c0_15, %c0_16] : memref<128x128xf32, #tpu.memory_space<vmem>>, vector<128x128xf32>
      %16 = arith.addf %15, %14 : vector<128x128xf32>
      %c0_17 = arith.constant 0 : index
      %c0_18 = arith.constant 0 : index
      %17 = vector.load %arg8[%c0_17, %c0_18] : memref<128x128xf32, #tpu.memory_space<vmem>>, vector<128x128xf32>
      tpu.vector_store %arg8[%c0_17, %c0_18], %16 {strides = array<i32>} : memref<128x128xf32, #tpu.memory_space<vmem>>, vector<128x128xf32>,
    } else {
    }
    return
  }
  func.func @transform_0(%arg0: i32, %arg1: i32, %arg2: i32) -> (i32, i32) {
    %c0_i32 = arith.constant 0 : i32
    return %arg0, %arg2 : i32, i32
  }
  func.func @transform_1(%arg0: i32, %arg1: i32, %arg2: i32) -> (i32, i32) {
    %c0_i32 = arith.constant 0 : i32
    return %arg2, %arg1 : i32, i32
  }
  func.func @transform_2(%arg0: i32, %arg1: i32, %arg2: i32) -> (i32, i32) {
    %c0_i32 = arith.constant 0 : i32
    %c0_i32_0 = arith.constant 0 : i32
    return %c0_i32, %arg1 : i32, i32
  }
  func.func @transform_3(%arg0: i32, %arg1: i32, %arg2: i32) -> (i32, i32) {
    %c0_i32 = arith.constant 0 : i32
    %c0_i32_0 = arith.constant 0 : i32
    return %arg0, %c0_i32 : i32, i32
  }
  func.func @transform_4(%arg0: i32, %arg1: i32, %arg2: i32) -> (i32, i32) {
    %c0_i32 = arith.constant 0 : i32
    %c0_i32_0 = arith.constant 0 : i32
    return %c0_i32, %arg1 : i32, i32
  }
  func.func @transform_5(%arg0: i32, %arg1: i32, %arg2: i32) -> (i32, i32) {
    %c0_i32 = arith.constant 0 : i32
    return %arg0, %arg1 : i32, i32
  }
}

</mosaic_0001>

<llo_original>
// kernel: tpu_custom_call.1
$region0: #{tpu_custom_call.1}
  #allocation0 [shape = 'u32[]', space=smem, size = 0x4, offset = 0x4, fixed_abs, tag = 'smem constant byte address 0x4 - core index']
  #allocation1 [shape = 'u32[144,128]{1,0:T(1,128)}', space=vmem, size = 0x12000, scoped, tag = 'internal scratch']
  #allocation2 [shape = 'f32[128,128]{1,0:T(8,128)}', space=vmem, size = 0x10000, scoped, tag = 'scratch operand']
  %s0 = inlined_call_operand.vmem [shape: f32[128,128], index: 0, kind: input, shape index: {}]
  %s1 = inlined_call_operand.hbm [shape: f32[128,256], index: 1, kind: input, shape index: {}]
  %s2 = inlined_call_operand.vmem [shape: f32[1,256], index: 2, kind: input, shape index: {}]
  %s3 = inlined_call_operand.vmem [shape: f32[128,8], index: 3, kind: input, shape index: {}]
  %s4 = inlined_call_operand.hbm [shape: f32[8,256], index: 4, kind: input, shape index: {}]
  %s5 = inlined_call_operand.hbm [shape: f32[128,256], index: 5, kind: output, shape index: {}]
  %s6 = sld [smem:[#allocation0]]
  $region69: #{tpu_custom_call.1} parent=0
    _
  %s8 = ssub.s32 1, %s6
  %s9 = scalar_select 0, %s8, %s6
  $region1: #{tpu_custom_call.1} parent=0
    #allocation3 [shape = 'u8[131072]{0}', space=vmem, size = 0x20000, scoped, tag = 'input window, operand 1']
    #allocation4 [shape = 's32[2]{0}', space=sflag, size = 0x8, scoped, tag = 'scoped memory for tpu_custom_call.1']
    #allocation5 [shape = 's32[2]{0}', space=sflag, size = 0x8, scoped, tag = 'scoped memory for tpu_custom_call.1']
    #allocation6 [shape = 'u8[8192]{0}', space=vmem, size = 0x2000, scoped, tag = 'input window, operand 4']
    #allocation7 [shape = 's32[2]{0}', space=sflag, size = 0x8, scoped, tag = 'scoped memory for tpu_custom_call.1']
    #allocation8 [shape = 'u8[131072]{0}', space=vmem, size = 0x20000, scoped, tag = 'output window, operand 0']
    %10 = vsyncpa [#allocation4], 0
    %s11 = scalar_lea.sflag [#allocation4], 1
    %12 = vsyncpa %s11, 0
    %13 = vsyncpa [#allocation7], 0
    %s14 = scalar_lea.sflag [#allocation7], 1
    %15 = vsyncpa %s14, 0
    %16 = vsyncpa [#allocation5], 0
    %s17 = scalar_lea.sflag [#allocation5], 1
    %18 = vsyncpa %s17, 0
    loop: start=0, step=1, limit=4
    $region2: #{tpu_custom_call.1} parent=1 // loop_pre_header
      _
    $region3: #{tpu_custom_call.1} parent=1 // loop_header
      %s20 = sphi 0, %s24
      %p21 = scmp.ge.s32.totalorder %s20, 4
      %s27 = sphi 0, %s46
      %s28 = sphi 0, %s42
      %s29 = sphi 0, %s38
      %s30 = sphi 0, %s27
      %s31 = sphi 0, %s28
      %s32 = sphi 0, %s29
      %s33 = sphi 0, %s30
      %s34 = sphi 0, %s31
      %s35 = sphi 0, %s32
      %s51 = sphi 0, %s53
      %s54 = sphi 0, %s51
      %s55 = sphi 0, %s54
      %s71 = sphi 0, %s55
      %s79 = sphi 0, %s81
      %s82 = sphi 0, %s79
      %s83 = sphi 0, %s82
      %s99 = sphi 0, %s83
      %s105 = sphi 0, %s107
      %s108 = sphi 0, %s105
      %s109 = sphi 0, %s108
      %s125 = sphi 0, %s109
      %s131 = sphi 0, %s133
      %s134 = sphi 0, %s131
      %s135 = sphi 0, %s134
      %s151 = sphi 0, %s135
      %s157 = sphi 0, %s159
      %s160 = sphi 0, %s157
      %s161 = sphi 0, %s160
      %s177 = sphi 0, %s161
      %s185 = sphi 0, %s187
      %s188 = sphi 0, %s185
      %s189 = sphi 0, %s188
      %s205 = sphi 0, %s189
    $region4: #{tpu_custom_call.1} parent=1 // loop_header_branch
      %23 = sbr.rel (%p21) target = $region8
    $region5: #{tpu_custom_call.1} parent=1 // loop_body
      %s25 = ssub.s32 %s20, 1
      %s26 = ssub.s32 %s20, 2
      %s36 = sadd.s32 1, %s29
      %p37 = scmp.ge.s32.totalorder %s36, 1
      %s38 = scalar_select %p37, 0, %s36
      %s39 = sadd.s32 1, %s28
      %s40 = scalar_select %p37, %s39, %s28
      %p41 = scmp.ge.s32.totalorder %s40, 2
      %s42 = scalar_select %p41, 0, %s40
      %s43 = sadd.s32 1, %s27
      %s44 = scalar_select %p41, %s43, %s27
      %p45 = scmp.ge.s32.totalorder %s44, 1
      %s46 = scalar_select %p45, 0, %s44
      %s47 = ssub.s32 %s27, %s46
      %s48 = ssub.s32 %s29, %s38
      %s49 = sor.u32 %s47, %s48
      %p50 = scmp.eq.s32.totalorder %s49, 0
      %s52 = sadd.s32 %s51, 1
      %s53 = scalar_select %p50, %s51, %s52
      %p56 = pneg %p50
      %p57 = scmp.eq.s32.totalorder %s20, 1
      %p58 = por %p56, %p57
      %p59 = scmp.ne.s32.totalorder %s51, %s54
      %p60 = scmp.eq.s32.totalorder %s20, 0
      %p61 = por %p59, %p60
      %p62 = scmp.ne.s32.totalorder %s51, %s54
      %p63 = scmp.eq.s32.totalorder %s25, 1
      %p64 = por %p62, %p63
      %p65 = scmp.ne.s32.totalorder %s54, %s55
      %p66 = scmp.eq.s32.totalorder %s25, 0
      %p67 = por %p65, %p66
      %p68 = scmp.ne.s32.totalorder %s54, %s55
      %p69 = scmp.eq.s32.totalorder %s26, 1
      %p70 = por %p68, %p69
      %p72 = scmp.ne.s32.totalorder %s55, %s71
      %p73 = scmp.eq.s32.totalorder %s26, 0
      %p74 = por %p72, %p73
      %s75 = ssub.s32 %s29, %s38
      %s76 = ssub.s32 %s28, %s42
      %s77 = sor.u32 %s75, %s76
      %p78 = scmp.eq.s32.totalorder %s77, 0
      %s80 = sadd.s32 %s79, 1
      %s81 = scalar_select %p78, %s79, %s80
      %p84 = pneg %p78
      %p85 = scmp.eq.s32.totalorder %s20, 1
      %p86 = por %p84, %p85
      %p87 = scmp.ne.s32.totalorder %s79, %s82
      %p88 = scmp.eq.s32.totalorder %s20, 0
      %p89 = por %p87, %p88
      %p90 = scmp.ne.s32.totalorder %s79, %s82
      %p91 = scmp.eq.s32.totalorder %s25, 1
      %p92 = por %p90, %p91
      %p93 = scmp.ne.s32.totalorder %s82, %s83
      %p94 = scmp.eq.s32.totalorder %s25, 0
      %p95 = por %p93, %p94
      %p96 = scmp.ne.s32.totalorder %s82, %s83
      %p97 = scmp.eq.s32.totalorder %s26, 1
      %p98 = por %p96, %p97
      %p100 = scmp.ne.s32.totalorder %s83, %s99
      %p101 = scmp.eq.s32.totalorder %s26, 0
      %p102 = por %p100, %p101
      %s103 = ssub.s32 %s28, %s42
      %p104 = scmp.eq.s32.totalorder %s103, 0
      %s106 = sadd.s32 %s105, 1
      %s107 = scalar_select %p104, %s105, %s106
      %p110 = pneg %p104
      %p111 = scmp.eq.s32.totalorder %s20, 1
      %p112 = por %p110, %p111
      %p113 = scmp.ne.s32.totalorder %s105, %s108
      %p114 = scmp.eq.s32.totalorder %s20, 0
      %p115 = por %p113, %p114
      %p116 = scmp.ne.s32.totalorder %s105, %s108
      %p117 = scmp.eq.s32.totalorder %s25, 1
      %p118 = por %p116, %p117
      %p119 = scmp.ne.s32.totalorder %s108, %s109
      %p120 = scmp.eq.s32.totalorder %s25, 0
      %p121 = por %p119, %p120
      %p122 = scmp.ne.s32.totalorder %s108, %s109
      %p123 = scmp.eq.s32.totalorder %s26, 1
      %p124 = por %p122, %p123
      %p126 = scmp.ne.s32.totalorder %s109, %s125
      %p127 = scmp.eq.s32.totalorder %s26, 0
      %p128 = por %p126, %p127
      %s129 = ssub.s32 %s27, %s46
      %p130 = scmp.eq.s32.totalorder %s129, 0
      %s132 = sadd.s32 %s131, 1
      %s133 = scalar_select %p130, %s131, %s132
      %p136 = pneg %p130
      %p137 = scmp.eq.s32.totalorder %s20, 1
      %p138 = por %p136, %p137
      %p139 = scmp.ne.s32.totalorder %s131, %s134
      %p140 = scmp.eq.s32.totalorder %s20, 0
      %p141 = por %p139, %p140
      %p142 = scmp.ne.s32.totalorder %s131, %s134
      %p143 = scmp.eq.s32.totalorder %s25, 1
      %p144 = por %p142, %p143
      %p145 = scmp.ne.s32.totalorder %s134, %s135
      %p146 = scmp.eq.s32.totalorder %s25, 0
      %p147 = por %p145, %p146
      %p148 = scmp.ne.s32.totalorder %s134, %s135
      %p149 = scmp.eq.s32.totalorder %s26, 1
      %p150 = por %p148, %p149
      %p152 = scmp.ne.s32.totalorder %s135, %s151
      %p153 = scmp.eq.s32.totalorder %s26, 0
      %p154 = por %p152, %p153
      %s155 = ssub.s32 %s28, %s42
      %p156 = scmp.eq.s32.totalorder %s155, 0
      %s158 = sadd.s32 %s157, 1
      %s159 = scalar_select %p156, %s157, %s158
      %p162 = pneg %p156
      %p163 = scmp.eq.s32.totalorder %s20, 1
      %p164 = por %p162, %p163
      %p165 = scmp.ne.s32.totalorder %s157, %s160
      %p166 = scmp.eq.s32.totalorder %s20, 0
      %p167 = por %p165, %p166
      %p168 = scmp.ne.s32.totalorder %s157, %s160
      %p169 = scmp.eq.s32.totalorder %s25, 1
      %p170 = por %p168, %p169
      %p171 = scmp.ne.s32.totalorder %s160, %s161
      %p172 = scmp.eq.s32.totalorder %s25, 0
      %p173 = por %p171, %p172
      %p174 = scmp.ne.s32.totalorder %s160, %s161
      %p175 = scmp.eq.s32.totalorder %s26, 1
      %p176 = por %p174, %p175
      %p178 = scmp.ne.s32.totalorder %s161, %s177
      %p179 = scmp.eq.s32.totalorder %s26, 0
      %p180 = por %p178, %p179
      %s181 = ssub.s32 %s27, %s46
      %s182 = ssub.s32 %s28, %s42
      %s183 = sor.u32 %s181, %s182
      %p184 = scmp.eq.s32.totalorder %s183, 0
      %s186 = sadd.s32 %s185, 1
      %s187 = scalar_select %p184, %s185, %s186
      %p190 = pneg %p184
      %p191 = scmp.eq.s32.totalorder %s20, 1
      %p192 = por %p190, %p191
      %p193 = scmp.ne.s32.totalorder %s185, %s188
      %p194 = scmp.eq.s32.totalorder %s20, 0
      %p195 = por %p193, %p194
      %p196 = scmp.ne.s32.totalorder %s185, %s188
      %p197 = scmp.eq.s32.totalorder %s25, 1
      %p198 = por %p196, %p197
      %p199 = scmp.ne.s32.totalorder %s188, %s189
      %p200 = scmp.eq.s32.totalorder %s25, 0
      %p201 = por %p199, %p200
      %p202 = scmp.ne.s32.totalorder %s188, %s189
      %p203 = scmp.eq.s32.totalorder %s26, 1
      %p204 = por %p202, %p203
      %p206 = scmp.ne.s32.totalorder %s189, %s205
      %p207 = scmp.eq.s32.totalorder %s26, 0
      %p208 = por %p206, %p207
      %p209 = scmp.le.s32.totalorder 1, %s20
      %p210 = scmp.lt.s32.totalorder %s20, 3
      %p211 = pnand %p209, %p210
      %p212 = pneg %p211
      // Predicated region
      $region9: #{tpu_custom_call.1} parent=5 // pred_check
        _
      $region10: #{tpu_custom_call.1} parent=5 // pred_check_branch
        %214 = sbr.rel (%p211) target = $region12
      $region11: #{tpu_custom_call.1} parent=5 // pred_region
        %s215 = ssub.s32 %s20, 1
        // Predicated region
        $region13: #{tpu_custom_call.1} parent=11 // pred_check
          %p216 = pneg %p67
        $region14: #{tpu_custom_call.1} parent=11 // pred_check_branch
          %218 = sbr.rel (%p216) target = $region16
        $region15: #{tpu_custom_call.1} parent=11 // pred_region
          %s219 = smul.u32 16, %s30
          %p220 = scmp.lt.s32.totalorder %s219, 15
          %s221 = scalar_select %p220, %s219, 15
          %p222 = scmp.lt.s32.totalorder %s32, 0
          %s223 = scalar_select %p222, %s32, 0
          %s224 = sadd.s32 %s223, %s221
          %s225 = smul.addr %s224, 8
          %s226 = scalar_lea.vmem %s0, %s225
          %s227 = smul.u32 16, %s30
        $region16: #{tpu_custom_call.1} parent=11 // pred_fallthru
          _
        // Predicated region
        $region17: #{tpu_custom_call.1} parent=11 // pred_check
          %p228 = pneg %p147
        $region18: #{tpu_custom_call.1} parent=11 // pred_check_branch
          %230 = sbr.rel (%p228) target = $region20
        $region19: #{tpu_custom_call.1} parent=11 // pred_region
          %s231 = smul.u32 16, %s30
          %p232 = scmp.lt.s32.totalorder %s231, 15
          %s233 = scalar_select %p232, %s231, 15
          %s234 = smul.addr %s233, 8
          %s235 = scalar_lea.vmem %s3, %s234
          %s236 = smul.u32 16, %s30
        $region20: #{tpu_custom_call.1} parent=11 // pred_fallthru
          _
      $region12: #{tpu_custom_call.1} parent=5 // pred_fallthru
        _
      %p237 = scmp.lt.s32.totalorder %s20, 2
      // Predicated region
      $region21: #{tpu_custom_call.1} parent=5 // pred_check
        %p238 = pneg %p237
      $region22: #{tpu_custom_call.1} parent=5 // pred_check_branch
        %240 = sbr.rel (%p238) target = $region24
      $region23: #{tpu_custom_call.1} parent=5 // pred_region
        // Predicated region
        $region25: #{tpu_custom_call.1} parent=23 // pred_check
          %p241 = pneg %p89
        $region26: #{tpu_custom_call.1} parent=23 // pred_check_branch
          %243 = sbr.rel (%p241) target = $region28
        $region27: #{tpu_custom_call.1} parent=23 // pred_region
          %s244 = sand.u32 %s79, 1
          %s245 = scalar_lea.sflag [#allocation4], %s244
          %s246 = sand.u32 %s79, 1
          %s247 = smul.addr %s246, 128
          %s248 = scalar_lea.vmem [#allocation3], %s247
          %s249 = smul.u32 16, %s29
          %s251 = ssub.s32 2048, 2048
          %252 = vsyncadd %s245, %s251
          %s253 = smul.addr %s249, 2
          %s254 = sadd.s32 %s28, %s253
          %s255 = smul.addr %s254, 128
          %s256 = scalar_lea.hbm %s1, %s255
          %s257 = sshll.u32 %s248, 4
          %s258 = int_to_ptr.vmem [resolvable:$true] %s257
          %263 = dma.hbm_to_vmem [thread:$0]  %s256, 2048, %s258, %s245, 256, 128, 8
        $region28: #{tpu_custom_call.1} parent=23 // pred_fallthru
          _
        // Predicated region
        $region29: #{tpu_custom_call.1} parent=23 // pred_check
          %p264 = pneg %p115
        $region30: #{tpu_custom_call.1} parent=23 // pred_check_branch
          %266 = sbr.rel (%p264) target = $region32
        $region31: #{tpu_custom_call.1} parent=23 // pred_region
          %p267 = scmp.lt.s32.totalorder %s28, 1
          %s268 = scalar_select %p267, %s28, 1
          %s269 = scalar_lea.vmem %s2, %s268
        $region32: #{tpu_custom_call.1} parent=23 // pred_fallthru
          _
        // Predicated region
        $region33: #{tpu_custom_call.1} parent=23 // pred_check
          %p270 = pneg %p167
        $region34: #{tpu_custom_call.1} parent=23 // pred_check_branch
          %272 = sbr.rel (%p270) target = $region36
        $region35: #{tpu_custom_call.1} parent=23 // pred_region
          %s273 = sand.u32 %s157, 1
          %s274 = scalar_lea.sflag [#allocation7], %s273
          %s275 = sand.u32 %s157, 1
          %s276 = smul.addr %s275, 8
          %s277 = scalar_lea.vmem [#allocation6], %s276
          %s279 = ssub.s32 128, 128
          %280 = vsyncadd %s274, %s279
          %s281 = smul.addr %s28, 128
          %s282 = scalar_lea.hbm %s4, %s281
          %s284 = sshll.u32 %s277, 4
          %s285 = int_to_ptr.vmem [resolvable:$true] %s284
          %287 = dma.hbm_to_vmem [thread:$0]  %s282, 128, %s285, %s274
        $region36: #{tpu_custom_call.1} parent=23 // pred_fallthru
          _
      $region24: #{tpu_custom_call.1} parent=5 // pred_fallthru
        _
      %p288 = scmp.le.s32.totalorder 1, %s20
      %p289 = scmp.lt.s32.totalorder %s20, 3
      %p290 = pnand %p288, %p289
      %p291 = pneg %p290
      // Predicated region
      $region37: #{tpu_custom_call.1} parent=5 // pred_check
        _
      $region38: #{tpu_custom_call.1} parent=5 // pred_check_branch
        %293 = sbr.rel (%p290) target = $region40
      $region39: #{tpu_custom_call.1} parent=5 // pred_region
        %s294 = ssub.s32 %s20, 1
        %s295 = sand.u32 %s82, 1
        %s296 = scalar_lea.sflag [#allocation4], %s295
        %s297 = sand.u32 %s82, 1
        %s298 = smul.addr %s297, 128
        %s299 = scalar_lea.vmem [#allocation3], %s298
        // Predicated region
        $region41: #{tpu_custom_call.1} parent=39 // pred_check
          %p300 = pneg %p95
        $region42: #{tpu_custom_call.1} parent=39 // pred_check_branch
          %302 = sbr.rel (%p300) target = $region44
        $region43: #{tpu_custom_call.1} parent=39 // pred_region
          %303 = dma.done %s296, 2048
        $region44: #{tpu_custom_call.1} parent=39 // pred_fallthru
          _
        %s304 = sand.u32 %s160, 1
        %s305 = scalar_lea.sflag [#allocation7], %s304
        %s306 = sand.u32 %s160, 1
        %s307 = smul.addr %s306, 8
        %s308 = scalar_lea.vmem [#allocation6], %s307
        // Predicated region
        $region45: #{tpu_custom_call.1} parent=39 // pred_check
          %p309 = pneg %p173
        $region46: #{tpu_custom_call.1} parent=39 // pred_check_branch
          %311 = sbr.rel (%p309) target = $region48
        $region47: #{tpu_custom_call.1} parent=39 // pred_region
          %312 = dma.done %s305, 128
        $region48: #{tpu_custom_call.1} parent=39 // pred_fallthru
          _
        %s313 = smul.u32 16, %s30
        %p314 = scmp.lt.s32.totalorder %s313, 15
        %s315 = scalar_select %p314, %s313, 15
        %p316 = scmp.lt.s32.totalorder %s32, 0
        %s317 = scalar_select %p316, %s32, 0
        %s318 = sadd.s32 %s317, %s315
        %s319 = smul.addr %s318, 8
        %s320 = scalar_lea.vmem %s0, %s319
        %p321 = pneg %p67
        %p322 = pneg %p64
        %s323 = sand.u32 %s82, 1
        %s324 = scalar_lea.sflag [#allocation4], %s323
        %s325 = sand.u32 %s82, 1
        %s326 = smul.addr %s325, 128
        %s327 = scalar_lea.vmem [#allocation3], %s326
        %p328 = pneg %p95
        %p329 = pneg %p92
        %p330 = scmp.lt.s32.totalorder %s31, 1
        %s331 = scalar_select %p330, %s31, 1
        %s332 = scalar_lea.vmem %s2, %s331
        %p333 = pneg %p121
        %p334 = pneg %p118
        %s335 = smul.u32 16, %s30
        %p336 = scmp.lt.s32.totalorder %s335, 15
        %s337 = scalar_select %p336, %s335, 15
        %s338 = smul.addr %s337, 8
        %s339 = scalar_lea.vmem %s3, %s338
        %p340 = pneg %p147
        %p341 = pneg %p144
        %s342 = sand.u32 %s160, 1
        %s343 = scalar_lea.sflag [#allocation7], %s342
        %s344 = sand.u32 %s160, 1
        %s345 = smul.addr %s344, 8
        %s346 = scalar_lea.vmem [#allocation6], %s345
        %p347 = pneg %p173
        %p348 = pneg %p170
        %p349 = pneg %p201
        %p350 = pneg %p198
        %s351 = sand.u32 %s188, 1
        %s352 = scalar_lea.sflag [#allocation5], %s351
        %s353 = sand.u32 %s188, 1
        %s354 = smul.addr %s353, 128
        %s355 = scalar_lea.vmem [#allocation8], %s354
        %s356 = smul.u32 16, %s30
        %p357 = scmp.lt.s32.totalorder %s356, 15
        %s358 = scalar_select %p357, %s356, 15
        %p359 = scmp.lt.s32.totalorder %s32, 0
        %s360 = scalar_select %p359, %s32, 0
        %s361 = sadd.s32 %s360, %s358
        %s362 = smul.addr %s361, 8
        %s363 = scalar_lea.vmem %s0, %s362
        %s364 = smul.u32 16, %s30
        %s365 = smul.u32 16, %s32
        %p366 = scmp.lt.s32.totalorder %s31, 1
        %s367 = scalar_select %p366, %s31, 1
        %s368 = scalar_lea.vmem %s2, %s367
        %s369 = smul.u32 16, %s30
        %p370 = scmp.lt.s32.totalorder %s369, 15
        %s371 = scalar_select %p370, %s369, 15
        %s372 = smul.addr %s371, 8
        %s373 = scalar_lea.vmem %s3, %s372
        %s374 = smul.u32 16, %s30
        %s375 = smul.u32 16, %s30
        %p376 = scmp.eq.s32.totalorder %s32, 0
        // Predicated region
        $region49: #{tpu_custom_call.1} parent=39 // pred_check
          %p377 = pneg %p376
        $region50: #{tpu_custom_call.1} parent=39 // pred_check_branch
          %379 = sbr.rel (%p377) target = $region52
        $region51: #{tpu_custom_call.1} parent=39 // pred_region
          %v380 = vld [vmem:[%s368] sm:$0x1]
          %v382 = vlaneseq
          %v383 = vshrl.u32 %v382, 7
          %v384 = vsub.s32 0, %v383
          %v385 = vrot.slane %v380, %v384
          %387 = vst [vmem:[#allocation2] sm:$0xff] %v385
          %388 = vst [vmem:[#allocation2 + $0x8] sm:$0xff] %v385
          %389 = vst [vmem:[#allocation2 + $0x10] sm:$0xff] %v385
          %390 = vst [vmem:[#allocation2 + $0x18] sm:$0xff] %v385
          %391 = vst [vmem:[#allocation2 + $0x20] sm:$0xff] %v385
          %392 = vst [vmem:[#allocation2 + $0x28] sm:$0xff] %v385
          %393 = vst [vmem:[#allocation2 + $0x30] sm:$0xff] %v385
          %394 = vst [vmem:[#allocation2 + $0x38] sm:$0xff] %v385
          %395 = vst [vmem:[#allocation2 + $0x40] sm:$0xff] %v385
          %396 = vst [vmem:[#allocation2 + $0x48] sm:$0xff] %v385
          %397 = vst [vmem:[#allocation2 + $0x50] sm:$0xff] %v385
          %398 = vst [vmem:[#allocation2 + $0x58] sm:$0xff] %v385
          %399 = vst [vmem:[#allocation2 + $0x60] sm:$0xff] %v385
          %400 = vst [vmem:[#allocation2 + $0x68] sm:$0xff] %v385
          %401 = vst [vmem:[#allocation2 + $0x70] sm:$0xff] %v385
          %402 = vst [vmem:[#allocation2 + $0x78] sm:$0xff] %v385
        $region52: #{tpu_custom_call.1} parent=39 // pred_fallthru
          _
        %v403 = vld [vmem:[#allocation2] sm:$0xff]
        %v404 = vld [vmem:[#allocation2 + $0x8] sm:$0xff]
        %v405 = vld [vmem:[#allocation2 + $0x10] sm:$0xff]
        %v406 = vld [vmem:[#allocation2 + $0x18] sm:$0xff]
        %v407 = vld [vmem:[#allocation2 + $0x20] sm:$0xff]
        %v408 = vld [vmem:[#allocation2 + $0x28] sm:$0xff]
        %v409 = vld [vmem:[#allocation2 + $0x30] sm:$0xff]
        %v410 = vld [vmem:[#allocation2 + $0x38] sm:$0xff]
        %v411 = vld [vmem:[#allocation2 + $0x40] sm:$0xff]
        %v412 = vld [vmem:[#allocation2 + $0x48] sm:$0xff]
        %v413 = vld [vmem:[#allocation2 + $0x50] sm:$0xff]
        %v414 = vld [vmem:[#allocation2 + $0x58] sm:$0xff]
        %v415 = vld [vmem:[#allocation2 + $0x60] sm:$0xff]
        %v416 = vld [vmem:[#allocation2 + $0x68] sm:$0xff]
        %v417 = vld [vmem:[#allocation2 + $0x70] sm:$0xff]
        %v418 = vld [vmem:[#allocation2 + $0x78] sm:$0xff]
        %v419 = vld [vmem:[%s363] sm:$0xff]
        %v420 = vld [vmem:[%s363 + $0x8] sm:$0xff]
        %v421 = vld [vmem:[%s363 + $0x10] sm:$0xff]
        %v422 = vld [vmem:[%s363 + $0x18] sm:$0xff]
        %v423 = vld [vmem:[%s363 + $0x20] sm:$0xff]
        %v424 = vld [vmem:[%s363 + $0x28] sm:$0xff]
        %v425 = vld [vmem:[%s363 + $0x30] sm:$0xff]
        %v426 = vld [vmem:[%s363 + $0x38] sm:$0xff]
        %v427 = vld [vmem:[%s363 + $0x40] sm:$0xff]
        %v428 = vld [vmem:[%s363 + $0x48] sm:$0xff]
        %v429 = vld [vmem:[%s363 + $0x50] sm:$0xff]
        %v430 = vld [vmem:[%s363 + $0x58] sm:$0xff]
        %v431 = vld [vmem:[%s363 + $0x60] sm:$0xff]
        %v432 = vld [vmem:[%s363 + $0x68] sm:$0xff]
        %v433 = vld [vmem:[%s363 + $0x70] sm:$0xff]
        %v434 = vld [vmem:[%s363 + $0x78] sm:$0xff]
        %v435 = vld [vmem:[%s299] sm:$0xff]
        %v436 = vld [vmem:[%s299 + $0x8] sm:$0xff]
        %v437 = vld [vmem:[%s299 + $0x10] sm:$0xff]
        %v438 = vld [vmem:[%s299 + $0x18] sm:$0xff]
        %v439 = vld [vmem:[%s299 + $0x20] sm:$0xff]
        %v440 = vld [vmem:[%s299 + $0x28] sm:$0xff]
        %v441 = vld [vmem:[%s299 + $0x30] sm:$0xff]
        %v442 = vld [vmem:[%s299 + $0x38] sm:$0xff]
        %v443 = vld [vmem:[%s299 + $0x40] sm:$0xff]
        %v444 = vld [vmem:[%s299 + $0x48] sm:$0xff]
        %v445 = vld [vmem:[%s299 + $0x50] sm:$0xff]
        %v446 = vld [vmem:[%s299 + $0x58] sm:$0xff]
        %v447 = vld [vmem:[%s299 + $0x60] sm:$0xff]
        %v448 = vld [vmem:[%s299 + $0x68] sm:$0xff]
        %v449 = vld [vmem:[%s299 + $0x70] sm:$0xff]
        %v450 = vld [vmem:[%s299 + $0x78] sm:$0xff]
        %451 = vmatprep.subr.mxu0 0.0
        %452 = vmatpush1.msra.mxu0 %v450
        %453 = vmatprep.subr.mxu0 0.0
        %454 = vmatpush1.msra.mxu0 %v449
        %455 = vmatprep.subr.mxu0 0.0
        %456 = vmatpush1.msra.mxu0 %v448
        %457 = vmatprep.subr.mxu0 0.0
        %458 = vmatpush1.msra.mxu0 %v447
        %459 = vmatprep.subr.mxu0 0.0
        %460 = vmatpush1.msra.mxu0 %v446
        %461 = vmatprep.subr.mxu0 0.0
        %462 = vmatpush1.msra.mxu0 %v445
        %463 = vmatprep.subr.mxu0 0.0
        %464 = vmatpush1.msra.mxu0 %v444
        %465 = vmatprep.subr.mxu0 0.0
        %466 = vmatpush1.msra.mxu0 %v443
        %467 = vmatprep.subr.mxu0 0.0
        %468 = vmatpush1.msra.mxu0 %v442
        %469 = vmatprep.subr.mxu0 0.0
        %470 = vmatpush1.msra.mxu0 %v441
        %471 = vmatprep.subr.mxu0 0.0
        %472 = vmatpush1.msra.mxu0 %v440
        %473 = vmatprep.subr.mxu0 0.0
        %474 = vmatpush1.msra.mxu0 %v439
        %475 = vmatprep.subr.mxu0 0.0
        %476 = vmatpush1.msra.mxu0 %v438
        %477 = vmatprep.subr.mxu0 0.0
        %478 = vmatpush1.msra.mxu0 %v437
        %479 = vmatprep.subr.mxu0 0.0
        %480 = vmatpush1.msra.mxu0 %v436
        %481 = vmatprep.subr.mxu0 0.0
        %482 = vmatpush1.msra.mxu0 %v435
        %483 = vmatprep.subr.mxu0 0.0
        %484 = vmatpush2.msra.mxu0 0.0
        %485 = vmatprep.subr.mxu0 0.0
        %486 = vmatpush2.msra.mxu0 0.0
        %487 = vmatprep.subr.mxu0 0.0
        %488 = vmatpush2.msra.mxu0 0.0
        %489 = vmatprep.subr.mxu0 0.0
        %490 = vmatpush2.msra.mxu0 0.0
        %491 = vmatprep.subr.mxu0 0.0
        %492 = vmatpush2.msra.mxu0 0.0
        %493 = vmatprep.subr.mxu0 0.0
        %494 = vmatpush2.msra.mxu0 0.0
        %495 = vmatprep.subr.mxu0 0.0
        %496 = vmatpush2.msra.mxu0 0.0
        %497 = vmatprep.subr.mxu0 0.0
        %498 = vmatpush2.msra.mxu0 0.0
        %499 = vmatprep.subr.mxu0 0.0
        %500 = vmatpush2.msra.mxu0 0.0
        %501 = vmatprep.subr.mxu0 0.0
        %502 = vmatpush2.msra.mxu0 0.0
        %503 = vmatprep.subr.mxu0 0.0
        %504 = vmatpush2.msra.mxu0 0.0
        %505 = vmatprep.subr.mxu0 0.0
        %506 = vmatpush2.msra.mxu0 0.0
        %507 = vmatprep.subr.mxu0 0.0
        %508 = vmatpush2.msra.mxu0 0.0
        %509 = vmatprep.subr.mxu0 0.0
        %510 = vmatpush2.msra.mxu0 0.0
        %511 = vmatprep.subr.mxu0 0.0
        %512 = vmatpush2.msra.mxu0 0.0
        %513 = vmatprep.subr.mxu0 0.0
        %514 = vmatpush2.msra.mxu0 0.0
        %515 = vmatprep.mubr.f32.mxu0 0.0
        %516 = vmatmul.mubr.f32.gmra.mxu0 %v419
        %v517 = vpop.f32.mrf.mxu0
        %v518 = vadd.f32 0.0, %v517
        %v519 = vpop.f32.mrf.mxu0
        %520 = vmatprep.mubr.f32.mxu0 0.0
        %521 = vmatmul.mubr.f32.gmra.mxu0 %v420
        %v522 = vpop.f32.mrf.mxu0
        %v523 = vadd.f32 0.0, %v522
        %v524 = vpop.f32.mrf.mxu0
        %525 = vmatprep.mubr.f32.mxu0 0.0
        %526 = vmatmul.mubr.f32.gmra.mxu0 %v421
        %v527 = vpop.f32.mrf.mxu0
        %v528 = vadd.f32 0.0, %v527
        %v529 = vpop.f32.mrf.mxu0
        %530 = vmatprep.mubr.f32.mxu0 0.0
        %531 = vmatmul.mubr.f32.gmra.mxu0 %v422
        %v532 = vpop.f32.mrf.mxu0
        %v533 = vadd.f32 0.0, %v532
        %v534 = vpop.f32.mrf.mxu0
        %535 = vmatprep.mubr.f32.mxu0 0.0
        %536 = vmatmul.mubr.f32.gmra.mxu0 %v423
        %v537 = vpop.f32.mrf.mxu0
        %v538 = vadd.f32 0.0, %v537
        %v539 = vpop.f32.mrf.mxu0
        %540 = vmatprep.mubr.f32.mxu0 0.0
        %541 = vmatmul.mubr.f32.gmra.mxu0 %v424
        %v542 = vpop.f32.mrf.mxu0
        %v543 = vadd.f32 0.0, %v542
        %v544 = vpop.f32.mrf.mxu0
        %545 = vmatprep.mubr.f32.mxu0 0.0
        %546 = vmatmul.mubr.f32.gmra.mxu0 %v425
        %v547 = vpop.f32.mrf.mxu0
        %v548 = vadd.f32 0.0, %v547
        %v549 = vpop.f32.mrf.mxu0
        %550 = vmatprep.mubr.f32.mxu0 0.0
        %551 = vmatmul.mubr.f32.gmra.mxu0 %v426
        %v552 = vpop.f32.mrf.mxu0
        %v553 = vadd.f32 0.0, %v552
        %v554 = vpop.f32.mrf.mxu0
        %555 = vmatprep.mubr.f32.mxu0 0.0
        %556 = vmatmul.mubr.f32.gmra.mxu0 %v427
        %v557 = vpop.f32.mrf.mxu0
        %v558 = vadd.f32 0.0, %v557
        %v559 = vpop.f32.mrf.mxu0
        %560 = vmatprep.mubr.f32.mxu0 0.0
        %561 = vmatmul.mubr.f32.gmra.mxu0 %v428
        %v562 = vpop.f32.mrf.mxu0
        %v563 = vadd.f32 0.0, %v562
        %v564 = vpop.f32.mrf.mxu0
        %565 = vmatprep.mubr.f32.mxu0 0.0
        %566 = vmatmul.mubr.f32.gmra.mxu0 %v429
        %v567 = vpop.f32.mrf.mxu0
        %v568 = vadd.f32 0.0, %v567
        %v569 = vpop.f32.mrf.mxu0
        %570 = vmatprep.mubr.f32.mxu0 0.0
        %571 = vmatmul.mubr.f32.gmra.mxu0 %v430
        %v572 = vpop.f32.mrf.mxu0
        %v573 = vadd.f32 0.0, %v572
        %v574 = vpop.f32.mrf.mxu0
        %575 = vmatprep.mubr.f32.mxu0 0.0
        %576 = vmatmul.mubr.f32.gmra.mxu0 %v431
        %v577 = vpop.f32.mrf.mxu0
        %v578 = vadd.f32 0.0, %v577
        %v579 = vpop.f32.mrf.mxu0
        %580 = vmatprep.mubr.f32.mxu0 0.0
        %581 = vmatmul.mubr.f32.gmra.mxu0 %v432
        %v582 = vpop.f32.mrf.mxu0
        %v583 = vadd.f32 0.0, %v582
        %v584 = vpop.f32.mrf.mxu0
        %585 = vmatprep.mubr.f32.mxu0 0.0
        %586 = vmatmul.mubr.f32.gmra.mxu0 %v433
        %v587 = vpop.f32.mrf.mxu0
        %v588 = vadd.f32 0.0, %v587
        %v589 = vpop.f32.mrf.mxu0
        %590 = vmatprep.mubr.f32.mxu0 0.0
        %591 = vmatmul.mubr.f32.gmra.mxu0 %v434
        %v592 = vpop.f32.mrf.mxu0
        %v593 = vadd.f32 0.0, %v592
        %v594 = vpop.f32.mrf.mxu0
        %595 = vdwg.mxu0
        %v596 = vadd.f32 %v403, %v518
        %v597 = vadd.f32 %v404, %v523
        %v598 = vadd.f32 %v405, %v528
        %v599 = vadd.f32 %v406, %v533
        %v600 = vadd.f32 %v407, %v538
        %v601 = vadd.f32 %v408, %v543
        %v602 = vadd.f32 %v409, %v548
        %v603 = vadd.f32 %v410, %v553
        %v604 = vadd.f32 %v411, %v558
        %v605 = vadd.f32 %v412, %v563
        %v606 = vadd.f32 %v413, %v568
        %v607 = vadd.f32 %v414, %v573
        %v608 = vadd.f32 %v415, %v578
        %v609 = vadd.f32 %v416, %v583
        %v610 = vadd.f32 %v417, %v588
        %v611 = vadd.f32 %v418, %v593
        %612 = vst [vmem:[#allocation2] sm:$0xff] %v596
        %613 = vst [vmem:[#allocation2 + $0x8] sm:$0xff] %v597
        %614 = vst [vmem:[#allocation2 + $0x10] sm:$0xff] %v598
        %615 = vst [vmem:[#allocation2 + $0x18] sm:$0xff] %v599
        %616 = vst [vmem:[#allocation2 + $0x20] sm:$0xff] %v600
        %617 = vst [vmem:[#allocation2 + $0x28] sm:$0xff] %v601
        %618 = vst [vmem:[#allocation2 + $0x30] sm:$0xff] %v602
        %619 = vst [vmem:[#allocation2 + $0x38] sm:$0xff] %v603
        %620 = vst [vmem:[#allocation2 + $0x40] sm:$0xff] %v604
        %621 = vst [vmem:[#allocation2 + $0x48] sm:$0xff] %v605
        %622 = vst [vmem:[#allocation2 + $0x50] sm:$0xff] %v606
        %623 = vst [vmem:[#allocation2 + $0x58] sm:$0xff] %v607
        %624 = vst [vmem:[#allocation2 + $0x60] sm:$0xff] %v608
        %625 = vst [vmem:[#allocation2 + $0x68] sm:$0xff] %v609
        %626 = vst [vmem:[#allocation2 + $0x70] sm:$0xff] %v610
        %627 = vst [vmem:[#allocation2 + $0x78] sm:$0xff] %v611
        // Predicated region
        $region53: #{tpu_custom_call.1} parent=39 // pred_check
          %p628 = pneg %p376
        $region54: #{tpu_custom_call.1} parent=39 // pred_check_branch
          %630 = sbr.rel (%p628) target = $region56
        $region55: #{tpu_custom_call.1} parent=39 // pred_region
          %v631 = vld [vmem:[%s373] sm:$0xff]
          %v632 = vld [vmem:[%s373 + $0x8] sm:$0xff]
          %v633 = vld [vmem:[%s373 + $0x10] sm:$0xff]
          %v634 = vld [vmem:[%s373 + $0x18] sm:$0xff]
          %v635 = vld [vmem:[%s373 + $0x20] sm:$0xff]
          %v636 = vld [vmem:[%s373 + $0x28] sm:$0xff]
          %v637 = vld [vmem:[%s373 + $0x30] sm:$0xff]
          %v638 = vld [vmem:[%s373 + $0x38] sm:$0xff]
          %v639 = vld [vmem:[%s373 + $0x40] sm:$0xff]
          %v640 = vld [vmem:[%s373 + $0x48] sm:$0xff]
          %v641 = vld [vmem:[%s373 + $0x50] sm:$0xff]
          %v642 = vld [vmem:[%s373 + $0x58] sm:$0xff]
          %v643 = vld [vmem:[%s373 + $0x60] sm:$0xff]
          %v644 = vld [vmem:[%s373 + $0x68] sm:$0xff]
          %v645 = vld [vmem:[%s373 + $0x70] sm:$0xff]
          %v646 = vld [vmem:[%s373 + $0x78] sm:$0xff]
          %v647 = vld [vmem:[%s308] sm:$0xff]
          %vm648 = vcmask 64512
          %v650 = vsel %vm648, %v631, 0
          %v653 = vsel %vm648, %v632, 0
          %v656 = vsel %vm648, %v633, 0
          %v659 = vsel %vm648, %v634, 0
          %v662 = vsel %vm648, %v635, 0
          %v665 = vsel %vm648, %v636, 0
          %v668 = vsel %vm648, %v637, 0
          %v671 = vsel %vm648, %v638, 0
          %v674 = vsel %vm648, %v639, 0
          %v677 = vsel %vm648, %v640, 0
          %v680 = vsel %vm648, %v641, 0
          %v683 = vsel %vm648, %v642, 0
          %v686 = vsel %vm648, %v643, 0
          %v689 = vsel %vm648, %v644, 0
          %v692 = vsel %vm648, %v645, 0
          %v695 = vsel %vm648, %v646, 0
          %697 = vmatprep.subr.mxu0 0.0
          %698 = vmatpush1.msra.mxu0 0.0
          %699 = vmatprep.subr.mxu0 0.0
          %700 = vmatpush1.msra.mxu0 0.0
          %701 = vmatprep.subr.mxu0 0.0
          %702 = vmatpush1.msra.mxu0 0.0
          %703 = vmatprep.subr.mxu0 0.0
          %704 = vmatpush1.msra.mxu0 0.0
          %705 = vmatprep.subr.mxu0 0.0
          %706 = vmatpush1.msra.mxu0 0.0
          %707 = vmatprep.subr.mxu0 0.0
          %708 = vmatpush1.msra.mxu0 0.0
          %709 = vmatprep.subr.mxu0 0.0
          %710 = vmatpush1.msra.mxu0 0.0
          %711 = vmatprep.subr.mxu0 0.0
          %712 = vmatpush1.msra.mxu0 0.0
          %713 = vmatprep.subr.mxu0 0.0
          %714 = vmatpush1.msra.mxu0 0.0
          %715 = vmatprep.subr.mxu0 0.0
          %716 = vmatpush1.msra.mxu0 0.0
          %717 = vmatprep.subr.mxu0 0.0
          %718 = vmatpush1.msra.mxu0 0.0
          %719 = vmatprep.subr.mxu0 0.0
          %720 = vmatpush1.msra.mxu0 0.0
          %721 = vmatprep.subr.mxu0 0.0
          %722 = vmatpush1.msra.mxu0 0.0
          %723 = vmatprep.subr.mxu0 0.0
          %724 = vmatpush1.msra.mxu0 0.0
          %725 = vmatprep.subr.mxu0 0.0
          %726 = vmatpush1.msra.mxu0 0.0
          %727 = vmatprep.subr.mxu0 0.0
          %728 = vmatpush1.msra.mxu0 %v647
          %729 = vmatprep.subr.mxu0 0.0
          %730 = vmatpush2.msra.mxu0 0.0
          %731 = vmatprep.subr.mxu0 0.0
          %732 = vmatpush2.msra.mxu0 0.0
          %733 = vmatprep.subr.mxu0 0.0
          %734 = vmatpush2.msra.mxu0 0.0
          %735 = vmatprep.subr.mxu0 0.0
          %736 = vmatpush2.msra.mxu0 0.0
          %737 = vmatprep.subr.mxu0 0.0
          %738 = vmatpush2.msra.mxu0 0.0
          %739 = vmatprep.subr.mxu0 0.0
          %740 = vmatpush2.msra.mxu0 0.0
          %741 = vmatprep.subr.mxu0 0.0
          %742 = vmatpush2.msra.mxu0 0.0
          %743 = vmatprep.subr.mxu0 0.0
          %744 = vmatpush2.msra.mxu0 0.0
          %745 = vmatprep.subr.mxu0 0.0
          %746 = vmatpush2.msra.mxu0 0.0
          %747 = vmatprep.subr.mxu0 0.0
          %748 = vmatpush2.msra.mxu0 0.0
          %749 = vmatprep.subr.mxu0 0.0
          %750 = vmatpush2.msra.mxu0 0.0
          %751 = vmatprep.subr.mxu0 0.0
          %752 = vmatpush2.msra.mxu0 0.0
          %753 = vmatprep.subr.mxu0 0.0
          %754 = vmatpush2.msra.mxu0 0.0
          %755 = vmatprep.subr.mxu0 0.0
          %756 = vmatpush2.msra.mxu0 0.0
          %757 = vmatprep.subr.mxu0 0.0
          %758 = vmatpush2.msra.mxu0 0.0
          %759 = vmatprep.subr.mxu0 0.0
          %760 = vmatpush2.msra.mxu0 0.0
          %761 = vmatprep.mubr.f32.mxu0 0.0
          %762 = vmatmul.mubr.f32.gmra.mxu0 %v650
          %v763 = vpop.f32.mrf.mxu0
          %v764 = vadd.f32 0.0, %v763
          %v765 = vpop.f32.mrf.mxu0
          %766 = vmatprep.mubr.f32.mxu0 0.0
          %767 = vmatmul.mubr.f32.gmra.mxu0 %v653
          %v768 = vpop.f32.mrf.mxu0
          %v769 = vadd.f32 0.0, %v768
          %v770 = vpop.f32.mrf.mxu0
          %771 = vmatprep.mubr.f32.mxu0 0.0
          %772 = vmatmul.mubr.f32.gmra.mxu0 %v656
          %v773 = vpop.f32.mrf.mxu0
          %v774 = vadd.f32 0.0, %v773
          %v775 = vpop.f32.mrf.mxu0
          %776 = vmatprep.mubr.f32.mxu0 0.0
          %777 = vmatmul.mubr.f32.gmra.mxu0 %v659
          %v778 = vpop.f32.mrf.mxu0
          %v779 = vadd.f32 0.0, %v778
          %v780 = vpop.f32.mrf.mxu0
          %781 = vmatprep.mubr.f32.mxu0 0.0
          %782 = vmatmul.mubr.f32.gmra.mxu0 %v662
          %v783 = vpop.f32.mrf.mxu0
          %v784 = vadd.f32 0.0, %v783
          %v785 = vpop.f32.mrf.mxu0
          %786 = vmatprep.mubr.f32.mxu0 0.0
          %787 = vmatmul.mubr.f32.gmra.mxu0 %v665
          %v788 = vpop.f32.mrf.mxu0
          %v789 = vadd.f32 0.0, %v788
          %v790 = vpop.f32.mrf.mxu0
          %791 = vmatprep.mubr.f32.mxu0 0.0
          %792 = vmatmul.mubr.f32.gmra.mxu0 %v668
          %v793 = vpop.f32.mrf.mxu0
          %v794 = vadd.f32 0.0, %v793
          %v795 = vpop.f32.mrf.mxu0
          %796 = vmatprep.mubr.f32.mxu0 0.0
          %797 = vmatmul.mubr.f32.gmra.mxu0 %v671
          %v798 = vpop.f32.mrf.mxu0
          %v799 = vadd.f32 0.0, %v798
          %v800 = vpop.f32.mrf.mxu0
          %801 = vmatprep.mubr.f32.mxu0 0.0
          %802 = vmatmul.mubr.f32.gmra.mxu0 %v674
          %v803 = vpop.f32.mrf.mxu0
          %v804 = vadd.f32 0.0, %v803
          %v805 = vpop.f32.mrf.mxu0
          %806 = vmatprep.mubr.f32.mxu0 0.0
          %807 = vmatmul.mubr.f32.gmra.mxu0 %v677
          %v808 = vpop.f32.mrf.mxu0
          %v809 = vadd.f32 0.0, %v808
          %v810 = vpop.f32.mrf.mxu0
          %811 = vmatprep.mubr.f32.mxu0 0.0
          %812 = vmatmul.mubr.f32.gmra.mxu0 %v680
          %v813 = vpop.f32.mrf.mxu0
          %v814 = vadd.f32 0.0, %v813
          %v815 = vpop.f32.mrf.mxu0
          %816 = vmatprep.mubr.f32.mxu0 0.0
          %817 = vmatmul.mubr.f32.gmra.mxu0 %v683
          %v818 = vpop.f32.mrf.mxu0
          %v819 = vadd.f32 0.0, %v818
          %v820 = vpop.f32.mrf.mxu0
          %821 = vmatprep.mubr.f32.mxu0 0.0
          %822 = vmatmul.mubr.f32.gmra.mxu0 %v686
          %v823 = vpop.f32.mrf.mxu0
          %v824 = vadd.f32 0.0, %v823
          %v825 = vpop.f32.mrf.mxu0
          %826 = vmatprep.mubr.f32.mxu0 0.0
          %827 = vmatmul.mubr.f32.gmra.mxu0 %v689
          %v828 = vpop.f32.mrf.mxu0
          %v829 = vadd.f32 0.0, %v828
          %v830 = vpop.f32.mrf.mxu0
          %831 = vmatprep.mubr.f32.mxu0 0.0
          %832 = vmatmul.mubr.f32.gmra.mxu0 %v692
          %v833 = vpop.f32.mrf.mxu0
          %v834 = vadd.f32 0.0, %v833
          %v835 = vpop.f32.mrf.mxu0
          %836 = vmatprep.mubr.f32.mxu0 0.0
          %837 = vmatmul.mubr.f32.gmra.mxu0 %v695
          %v838 = vpop.f32.mrf.mxu0
          %v839 = vadd.f32 0.0, %v838
          %v840 = vpop.f32.mrf.mxu0
          %841 = vdwg.mxu0
          %v842 = vld [vmem:[#allocation2] sm:$0xff]
          %v843 = vld [vmem:[#allocation2 + $0x8] sm:$0xff]
          %v844 = vld [vmem:[#allocation2 + $0x10] sm:$0xff]
          %v845 = vld [vmem:[#allocation2 + $0x18] sm:$0xff]
          %v846 = vld [vmem:[#allocation2 + $0x20] sm:$0xff]
          %v847 = vld [vmem:[#allocation2 + $0x28] sm:$0xff]
          %v848 = vld [vmem:[#allocation2 + $0x30] sm:$0xff]
          %v849 = vld [vmem:[#allocation2 + $0x38] sm:$0xff]
          %v850 = vld [vmem:[#allocation2 + $0x40] sm:$0xff]
          %v851 = vld [vmem:[#allocation2 + $0x48] sm:$0xff]
          %v852 = vld [vmem:[#allocation2 + $0x50] sm:$0xff]
          %v853 = vld [vmem:[#allocation2 + $0x58] sm:$0xff]
          %v854 = vld [vmem:[#allocation2 + $0x60] sm:$0xff]
          %v855 = vld [vmem:[#allocation2 + $0x68] sm:$0xff]
          %v856 = vld [vmem:[#allocation2 + $0x70] sm:$0xff]
          %v857 = vld [vmem:[#allocation2 + $0x78] sm:$0xff]
          %v858 = vadd.f32 %v842, %v764
          %v859 = vadd.f32 %v843, %v769
          %v860 = vadd.f32 %v844, %v774
          %v861 = vadd.f32 %v845, %v779
          %v862 = vadd.f32 %v846, %v784
          %v863 = vadd.f32 %v847, %v789
          %v864 = vadd.f32 %v848, %v794
          %v865 = vadd.f32 %v849, %v799
          %v866 = vadd.f32 %v850, %v804
          %v867 = vadd.f32 %v851, %v809
          %v868 = vadd.f32 %v852, %v814
          %v869 = vadd.f32 %v853, %v819
          %v870 = vadd.f32 %v854, %v824
          %v871 = vadd.f32 %v855, %v829
          %v872 = vadd.f32 %v856, %v834
          %v873 = vadd.f32 %v857, %v839
          %874 = vst [vmem:[%s355] sm:$0xff] %v858
          %875 = vst [vmem:[%s355 + $0x8] sm:$0xff] %v859
          %876 = vst [vmem:[%s355 + $0x10] sm:$0xff] %v860
          %877 = vst [vmem:[%s355 + $0x18] sm:$0xff] %v861
          %878 = vst [vmem:[%s355 + $0x20] sm:$0xff] %v862
          %879 = vst [vmem:[%s355 + $0x28] sm:$0xff] %v863
          %880 = vst [vmem:[%s355 + $0x30] sm:$0xff] %v864
          %881 = vst [vmem:[%s355 + $0x38] sm:$0xff] %v865
          %882 = vst [vmem:[%s355 + $0x40] sm:$0xff] %v866
          %883 = vst [vmem:[%s355 + $0x48] sm:$0xff] %v867
          %884 = vst [vmem:[%s355 + $0x50] sm:$0xff] %v868
          %885 = vst [vmem:[%s355 + $0x58] sm:$0xff] %v869
          %886 = vst [vmem:[%s355 + $0x60] sm:$0xff] %v870
          %887 = vst [vmem:[%s355 + $0x68] sm:$0xff] %v871
          %888 = vst [vmem:[%s355 + $0x70] sm:$0xff] %v872
          %889 = vst [vmem:[%s355 + $0x78] sm:$0xff] %v873
        $region56: #{tpu_custom_call.1} parent=39 // pred_fallthru
          _
        %s890 = sand.u32 %s188, 1
        %s891 = scalar_lea.sflag [#allocation5], %s890
        %s892 = sand.u32 %s188, 1
        %s893 = smul.addr %s892, 128
        %s894 = scalar_lea.vmem [#allocation8], %s893
        // Predicated region
        $region57: #{tpu_custom_call.1} parent=39 // pred_check
          %p895 = pneg %p198
        $region58: #{tpu_custom_call.1} parent=39 // pred_check_branch
          %897 = sbr.rel (%p895) target = $region60
        $region59: #{tpu_custom_call.1} parent=39 // pred_region
          %s898 = smul.u32 16, %s30
          %s900 = ssub.s32 2048, 2048
          %901 = vsyncadd %s891, %s900
          %s902 = smul.addr %s898, 2
          %s903 = sadd.s32 %s31, %s902
          %s904 = smul.addr %s903, 128
          %s905 = scalar_lea.hbm %s5, %s904
          %s906 = sshll.u32 %s894, 4
          %s907 = int_to_ptr.vmem [resolvable:$true] %s906
          %912 = dma.vmem_to_hbm [thread:$0]  %s907, 2048, %s905, %s891, 128, 256, 8
        $region60: #{tpu_custom_call.1} parent=39 // pred_fallthru
          _
      $region40: #{tpu_custom_call.1} parent=5 // pred_fallthru
        _
      %p913 = scmp.le.s32.totalorder 2, %s20
      // Predicated region
      $region61: #{tpu_custom_call.1} parent=5 // pred_check
        %p914 = pneg %p913
      $region62: #{tpu_custom_call.1} parent=5 // pred_check_branch
        %916 = sbr.rel (%p914) target = $region64
      $region63: #{tpu_custom_call.1} parent=5 // pred_region
        %s917 = ssub.s32 %s20, 2
        // Predicated region
        $region65: #{tpu_custom_call.1} parent=63 // pred_check
          %p918 = pneg %p204
        $region66: #{tpu_custom_call.1} parent=63 // pred_check_branch
          %920 = sbr.rel (%p918) target = $region68
        $region67: #{tpu_custom_call.1} parent=63 // pred_region
          %s921 = sand.u32 %s189, 1
          %s922 = scalar_lea.sflag [#allocation5], %s921
          %s923 = sand.u32 %s189, 1
          %s924 = smul.addr %s923, 128
          %s925 = scalar_lea.vmem [#allocation8], %s924
          %926 = dma.done %s922, 2048
        $region68: #{tpu_custom_call.1} parent=63 // pred_fallthru
          _
      $region64: #{tpu_custom_call.1} parent=5 // pred_fallthru
        _
    $region6: #{tpu_custom_call.1} parent=1 // loop_footer
      %s24 = sadd.s32 1, %s20
    $region7: #{tpu_custom_call.1} parent=1 // loop_footer_branch
      %19 = sbr.rel target = $region3
    $region8: #{tpu_custom_call.1} parent=1 // loop_exit
      _
    %927 = vsyncpa [#allocation4], 1
    %s928 = scalar_lea.sflag [#allocation4], 1
    %929 = vsyncpa %s928, 1
    %930 = vsyncpa [#allocation7], 1
    %s931 = scalar_lea.sflag [#allocation7], 1
    %932 = vsyncpa %s931, 1
    %933 = vsyncpa [#allocation5], 1
    %s934 = scalar_lea.sflag [#allocation5], 1
    %935 = vsyncpa %s934, 1

</llo_original>
